<compile_context>
chip_gen: v5e
topology: v5e:2x2
jax: 0.10.0
libtpu: 0.0.40
codegen_flags: <defaults>
</compile_context>

<pallas_src>
import jax
import jax.numpy as jnp
from jax.experimental import pallas as pl
from jax.experimental.pallas import tpu as pltpu


def actor_kernel(x_ref, w1_ref, b1_ref, w2_ref, b2_ref, w3_ref, b3_ref, out_ref):
    x = x_ref[...]                                                     # [tb, D] native layout
    # Layer 1: contract over D (dim 1 of both operands) -> [H1, tb]; batch lands
    # on lanes without any wrapper-side transpose of x.
    h1 = jnp.tanh(
        jax.lax.dot_general(
            w1_ref[...], x,
            dimension_numbers=(((1,), (1,)), ((), ())),
            preferred_element_type=jnp.float32,
        )
        + b1_ref[...]
    )                                                                  # [64, tb]
    # Layer 2: Linear + Tanh (MXU matmul, EUP tanh)
    h2 = jnp.tanh(
        jnp.dot(w2_ref[...], h1, preferred_element_type=jnp.float32)  # [32, tb]
        + b2_ref[...]
    )
    # Layer 3: Linear (logits)
    logits = (
        jnp.dot(w3_ref[...], h2, preferred_element_type=jnp.float32)  # [A,  tb]
        + b3_ref[...]
    )
    # Numerically stable softmax over the action (sublane) axis.
    m = jnp.max(logits, axis=0, keepdims=True)                        # [1, tb]
    e = jnp.exp(logits - m)
    denom = jnp.sum(e, axis=0, keepdims=True)
    # Exact divide on one [1, tb] vreg: probability columns sum to 1 to f32
    # precision (the approx-reciprocal path did not).
    out_ref[...] = e / denom


def _device_kind():
    try:
        return jax.devices()[0].device_kind.lower()
    except Exception:
        return ""


def _num_tensorcores():
    # v5e / v6e expose one TensorCore per chip; v7x exposes two.
    return 2 if "v7" in _device_kind() else 1


def _default_batch_tile(B):
    n_cores = _num_tensorcores()
    kind = _device_kind()
    # VMEM capacity is a non-issue here (<2 MiB footprint even at tb=8192); the
    # real ceiling is vreg/spill traffic of the [64, tb] / [32, tb]
    # intermediates. v5e's single vector-store slot saturates earliest, so cap
    # lower there.
    cap = 2048 if "v5" in kind else 8192

    # Exactly one block per TensorCore when the split is lane-aligned.
    if n_cores > 1 and B % n_cores == 0:
        tb = B // n_cores
        if (tb == B or tb % 128 == 0) and tb <= cap:
            return tb
    # Single-TC chips (or small batches): one grid step — per-step overhead
    # (~0.35 us) dominates this tiny kernel, so fewer, larger steps win.
    if B <= cap:
        return B
    # Large batches: largest lane-aligned divisor <= cap whose block count is a
    # multiple of the core count (keeps v7x load-balanced).
    t = cap
    while t >= 128:
        if B % t == 0 and (B // t) % n_cores == 0:
            return t
        t -= 128
    return B  # awkward batch size: correct but silently serial (single block)


def actor_forward(x, params, *, batch_tile=None, transpose_output=True):
    B, D = x.shape
    w1, b1, w2, b2, w3, b3 = params
    H1 = w1.shape[0]
    H2 = w2.shape[0]
    A = w3.shape[0]

    tb = batch_tile if batch_tile is not None else _default_batch_tile(B)
    assert B % tb == 0, "batch must be divisible by batch_tile"
    assert tb == B or tb % 128 == 0, (
        "batch_tile must be lane-aligned (multiple of 128) unless it covers the whole batch"
    )

    grid = (B // tb,)

    # Resident weights/biases (constant index_map); x tiled over batch in its
    # native row-major layout.  (Single-buffering the resident operands via
    # pipeline_mode is a further minor win but is left to the compiler here.)
    in_specs = [
        pl.BlockSpec((tb, D), lambda i: (i, 0)),     # x   : tiled over batch
        pl.BlockSpec((H1, D), lambda i: (0, 0)),     # W1  : resident
        pl.BlockSpec((H1, 1), lambda i: (0, 0)),     # b1
        pl.BlockSpec((H2, H1), lambda i: (0, 0)),    # W2
        pl.BlockSpec((H2, 1), lambda i: (0, 0)),     # b2
        pl.BlockSpec((A, H2), lambda i: (0, 0)),     # W3
        pl.BlockSpec((A, 1), lambda i: (0, 0)),      # b3
    ]
    out_specs = pl.BlockSpec((A, tb), lambda i: (0, i))  # lane-dense output slab

    probs_T = pl.pallas_call(
        actor_kernel,
        out_shape=jax.ShapeDtypeStruct((A, B), jnp.float32),
        grid_spec=pl.GridSpec(
            grid=grid,
            in_specs=in_specs,
            out_specs=out_specs,
        ),
        compiler_params=pltpu.CompilerParams(
            dimension_semantics=("parallel",),  # batch blocks shard across v7x's 2 TCs
        ),
    )(x, w1, b1, w2, b2, w3, b3)

    # PyTorch convention is [B, A]. In a hot PPO loop prefer
    # transpose_output=False and consume the [A, B] slab directly to skip this
    # extra (tiny) XLA transpose per step.
    return probs_T.T if transpose_output else probs_T


def init_actor_params(key, obs_dim, n_actions, h1=64, h2=32):
    """Deterministic init mimicking PyTorch nn.Linear default (U[-1/sqrt(fan_in), +]).

    Weights kept in PyTorch-native [out, in] layout; biases as [out, 1] columns
    so they broadcast across the lane (batch) axis inside the kernel.
    """
    ks = jax.random.split(key, 6)

    def linear(kw, kb, fan_in, fan_out):
        bound = 1.0 / jnp.sqrt(jnp.float32(fan_in))
        w = jax.random.uniform(kw, (fan_out, fan_in), jnp.float32, -bound, bound)
        b = jax.random.uniform(kb, (fan_out, 1), jnp.float32, -bound, bound)
        return w, b

    w1, b1 = linear(ks[0], ks[1], obs_dim, h1)
    w2, b2 = linear(ks[2], ks[3], h1, h2)
    w3, b3 = linear(ks[4], ks[5], h2, n_actions)
    return (w1, b1, w2, b2, w3, b3)


if __name__ == "__main__":
    key = jax.random.PRNGKey(0)
    k_x, k_p = jax.random.split(key)

    # PPO-minibatch-like shapes: 256 observations, obs_dim=8, 4 discrete actions.
    B, OBS_DIM, N_ACTIONS = 256, 8, 4
    x = jax.random.normal(k_x, (B, OBS_DIM), dtype=jnp.float32)
    params = init_actor_params(k_p, OBS_DIM, N_ACTIONS)

    probs = actor_forward(x, params)
    probs = jax.block_until_ready(probs)

    # Sanity check vs. pure-JAX reference.
    w1, b1, w2, b2, w3, b3 = params
    h1 = jnp.tanh(x @ w1.T + b1[:, 0])
    h2 = jnp.tanh(h1 @ w2.T + b2[:, 0])
    ref = jax.nn.softmax(h2 @ w3.T + b3[:, 0], axis=-1)

    assert probs.shape == (B, N_ACTIONS)
    assert jnp.allclose(probs, ref, atol=1e-5, rtol=1e-5)
    assert jnp.allclose(jnp.sum(probs, axis=-1), 1.0, atol=1e-5)

    print("KERNEL_OK")
</pallas_src>

<mosaic_0001>
module attributes {stable_mosaic.version = 11 : i64} {
  func.func @actor_kernel(%arg0: i32, %arg1: memref<256x8xf32, #tpu.memory_space<vmem>>, %arg2: memref<64x8xf32, #tpu.memory_space<vmem>>, %arg3: memref<64x1xf32, #tpu.memory_space<vmem>>, %arg4: memref<32x64xf32, #tpu.memory_space<vmem>>, %arg5: memref<32x1xf32, #tpu.memory_space<vmem>>, %arg6: memref<4x32xf32, #tpu.memory_space<vmem>>, %arg7: memref<4x1xf32, #tpu.memory_space<vmem>>, %arg8: memref<4x256xf32, #tpu.memory_space<vmem>>) attributes {dimension_semantics = [#tpu.dimension_semantics<parallel>], iteration_bounds = array<i64: 1>, scalar_prefetch = 0 : i64, scratch_operands = 0 : i64, tpu.core_type = #tpu.core_type<tc>, window_params = [{transform_indices = @transform_0, window_bounds = array<i64: 256, 8>}, {pipeline_mode = #tpu.pipeline_mode<synchronous>, transform_indices = @transform_1, window_bounds = array<i64: 64, 8>}, {pipeline_mode = #tpu.pipeline_mode<synchronous>, transform_indices = @transform_2, window_bounds = array<i64: 64, 1>}, {pipeline_mode = #tpu.pipeline_mode<synchronous>, transform_indices = @transform_3, window_bounds = array<i64: 32, 64>}, {pipeline_mode = #tpu.pipeline_mode<synchronous>, transform_indices = @transform_4, window_bounds = array<i64: 32, 1>}, {pipeline_mode = #tpu.pipeline_mode<synchronous>, transform_indices = @transform_5, window_bounds = array<i64: 4, 32>}, {pipeline_mode = #tpu.pipeline_mode<synchronous>, transform_indices = @transform_6, window_bounds = array<i64: 4, 1>}, {transform_indices = @transform_7, window_bounds = array<i64: 4, 256>}]} {
    %c0 = arith.constant 0 : index
    %c0_0 = arith.constant 0 : index
    %0 = vector.load %arg1[%c0, %c0_0] : memref<256x8xf32, #tpu.memory_space<vmem>>, vector<256x8xf32>
    %c0_1 = arith.constant 0 : index
    %c0_2 = arith.constant 0 : index
    %1 = vector.load %arg2[%c0_1, %c0_2] : memref<64x8xf32, #tpu.memory_space<vmem>>, vector<64x8xf32>
    %cst = arith.constant dense<0.000000e+00> : vector<64x256xf32>
    %2 = tpu.matmul %1, %0, %cst {dimension_numbers = #tpu.dot_dimension_numbers<[1], [1], [0], [0], [0, 0, 1, 0], [], []>} : vector<64x8xf32>, vector<256x8xf32>, vector<64x256xf32> -> vector<64x256xf32>
    %c0_3 = arith.constant 0 : index
    %c0_4 = arith.constant 0 : index
    %3 = vector.load %arg3[%c0_3, %c0_4] : memref<64x1xf32, #tpu.memory_space<vmem>>, vector<64x1xf32>
    %4 = vector.broadcast %3 : vector<64x1xf32> to vector<64x256xf32>
    %5 = arith.addf %2, %4 : vector<64x256xf32>
    %6 = math.tanh %5 : vector<64x256xf32>
    %c0_5 = arith.constant 0 : index
    %c0_6 = arith.constant 0 : index
    %7 = vector.load %arg4[%c0_5, %c0_6] : memref<32x64xf32, #tpu.memory_space<vmem>>, vector<32x64xf32>
    %cst_7 = arith.constant dense<0.000000e+00> : vector<32x256xf32>
    %8 = tpu.matmul %7, %6, %cst_7 {dimension_numbers = #tpu.dot_dimension_numbers<[1], [0], [0], [1], [0, 0, 1, 1], [], []>} : vector<32x64xf32>, vector<64x256xf32>, vector<32x256xf32> -> vector<32x256xf32>
    %c0_8 = arith.constant 0 : index
    %c0_9 = arith.constant 0 : index
    %9 = vector.load %arg5[%c0_8, %c0_9] : memref<32x1xf32, #tpu.memory_space<vmem>>, vector<32x1xf32>
    %10 = vector.broadcast %9 : vector<32x1xf32> to vector<32x256xf32>
    %11 = arith.addf %8, %10 : vector<32x256xf32>
    %12 = math.tanh %11 : vector<32x256xf32>
    %c0_10 = arith.constant 0 : index
    %c0_11 = arith.constant 0 : index
    %13 = vector.load %arg6[%c0_10, %c0_11] : memref<4x32xf32, #tpu.memory_space<vmem>>, vector<4x32xf32>
    %cst_12 = arith.constant dense<0.000000e+00> : vector<4x256xf32>
    %14 = tpu.matmul %13, %12, %cst_12 {dimension_numbers = #tpu.dot_dimension_numbers<[1], [0], [0], [1], [0, 0, 1, 1], [], []>} : vector<4x32xf32>, vector<32x256xf32>, vector<4x256xf32> -> vector<4x256xf32>
    %c0_13 = arith.constant 0 : index
    %c0_14 = arith.constant 0 : index
    %15 = vector.load %arg7[%c0_13, %c0_14] : memref<4x1xf32, #tpu.memory_space<vmem>>, vector<4x1xf32>
    %16 = vector.broadcast %15 : vector<4x1xf32> to vector<4x256xf32>
    %17 = arith.addf %14, %16 : vector<4x256xf32>
    %cst_15 = arith.constant dense<0xFF800000> : vector<256xf32>
    %18 = vector.multi_reduction <maximumf>, %17, %cst_15 [0] : vector<4x256xf32> to vector<256xf32>
    %19 = vector.shape_cast %18 : vector<256xf32> to vector<1x256xf32>
    %20 = vector.broadcast %19 : vector<1x256xf32> to vector<4x256xf32>
    %21 = arith.subf %17, %20 : vector<4x256xf32>
    %22 = math.exp %21 : vector<4x256xf32>
    %cst_16 = arith.constant dense<0.000000e+00> : vector<256xf32>
    %23 = vector.multi_reduction <add>, %22, %cst_16 [0] : vector<4x256xf32> to vector<256xf32>
    %24 = vector.shape_cast %23 : vector<256xf32> to vector<1x256xf32>
    %25 = vector.broadcast %24 : vector<1x256xf32> to vector<4x256xf32>
    %26 = arith.divf %22, %25 : vector<4x256xf32>
    %c0_17 = arith.constant 0 : index
    %c0_18 = arith.constant 0 : index
    %27 = vector.load %arg8[%c0_17, %c0_18] : memref<4x256xf32, #tpu.memory_space<vmem>>, vector<4x256xf32>
    tpu.vector_store %arg8[%c0_17, %c0_18], %26 {strides = array<i32>} : memref<4x256xf32, #tpu.memory_space<vmem>>, vector<4x256xf32>,
    return
  }
  func.func @transform_0(%arg0: i32) -> (i32, i32) {
    %c0_i32 = arith.constant 0 : i32
    %c0_i32_0 = arith.constant 0 : i32
    return %arg0, %c0_i32 : i32, i32
  }
  func.func @transform_1(%arg0: i32) -> (i32, i32) {
    %c0_i32 = arith.constant 0 : i32
    %c0_i32_0 = arith.constant 0 : i32
    %c0_i32_1 = arith.constant 0 : i32
    return %c0_i32, %c0_i32_0 : i32, i32
  }
  func.func @transform_2(%arg0: i32) -> (i32, i32) {
    %c0_i32 = arith.constant 0 : i32
    %c0_i32_0 = arith.constant 0 : i32
    %c0_i32_1 = arith.constant 0 : i32
    return %c0_i32, %c0_i32_0 : i32, i32
  }
  func.func @transform_3(%arg0: i32) -> (i32, i32) {
    %c0_i32 = arith.constant 0 : i32
    %c0_i32_0 = arith.constant 0 : i32
    %c0_i32_1 = arith.constant 0 : i32
    return %c0_i32, %c0_i32_0 : i32, i32
  }
  func.func @transform_4(%arg0: i32) -> (i32, i32) {
    %c0_i32 = arith.constant 0 : i32
    %c0_i32_0 = arith.constant 0 : i32
    %c0_i32_1 = arith.constant 0 : i32
    return %c0_i32, %c0_i32_0 : i32, i32
  }
  func.func @transform_5(%arg0: i32) -> (i32, i32) {
    %c0_i32 = arith.constant 0 : i32
    %c0_i32_0 = arith.constant 0 : i32
    %c0_i32_1 = arith.constant 0 : i32
    return %c0_i32, %c0_i32_0 : i32, i32
  }
  func.func @transform_6(%arg0: i32) -> (i32, i32) {
    %c0_i32 = arith.constant 0 : i32
    %c0_i32_0 = arith.constant 0 : i32
    %c0_i32_1 = arith.constant 0 : i32
    return %c0_i32, %c0_i32_0 : i32, i32
  }
  func.func @transform_7(%arg0: i32) -> (i32, i32) {
    %c0_i32 = arith.constant 0 : i32
    %c0_i32_0 = arith.constant 0 : i32
    return %c0_i32, %arg0 : i32, i32
  }
}

</mosaic_0001>

<llo_original>
// kernel: tpu_custom_call.1
$region0: #{tpu_custom_call.1}
  #allocation0 [shape = 'u32[]', space=smem, size = 0x4, offset = 0x4, fixed_abs, tag = 'smem constant byte address 0x4 - core index']
  #allocation1 [shape = 'u32[72,128]{1,0:T(1,128)}', space=vmem, size = 0x9000, scoped, tag = 'internal scratch']
  %s0 = inlined_call_operand.vmem [shape: f32[256,8], index: 0, kind: input, shape index: {}]
  %s1 = inlined_call_operand.vmem [shape: f32[64,8], index: 1, kind: input, shape index: {}]
  %s2 = inlined_call_operand.vmem [shape: f32[64,1], index: 2, kind: input, shape index: {}]
  %s3 = inlined_call_operand.vmem [shape: f32[32,64], index: 3, kind: input, shape index: {}]
  %s4 = inlined_call_operand.vmem [shape: f32[32,1], index: 4, kind: input, shape index: {}]
  %s5 = inlined_call_operand.vmem [shape: f32[4,32], index: 5, kind: input, shape index: {}]
  %s6 = inlined_call_operand.vmem [shape: f32[4,1], index: 6, kind: input, shape index: {}]
  %s7 = inlined_call_operand.hbm [shape: f32[4,256], index: 7, kind: output, shape index: {}]
  %s8 = sld [smem:[#allocation0]]
  $region38: #{tpu_custom_call.1} parent=0
    _
  %s10 = ssub.s32 1, %s8
  %s11 = scalar_select 0, %s10, %s8
  $region1: #{tpu_custom_call.1} parent=0
    #allocation2 [shape = 'u8[4096]{0}', space=vmem, size = 0x1000, scoped, tag = 'output window, operand 0, single buffered']
    #allocation3 [shape = 's32[1]{0}', space=sflag, size = 0x4, scoped, tag = 'scoped memory for tpu_custom_call.1']
    %12 = vsyncpa [#allocation3], 0
    // Predicated region
    $region2: #{tpu_custom_call.1} parent=1 // pred_check
      _
    $region3: #{tpu_custom_call.1} parent=1 // pred_check_branch
      %14 = sbr.rel (0) target = $region5
    $region4: #{tpu_custom_call.1} parent=1 // pred_region
      _
    $region5: #{tpu_custom_call.1} parent=1 // pred_fallthru
      _
    // Predicated region
    $region6: #{tpu_custom_call.1} parent=1 // pred_check
      _
    $region7: #{tpu_custom_call.1} parent=1 // pred_check_branch
      %16 = sbr.rel (0) target = $region9
    $region8: #{tpu_custom_call.1} parent=1 // pred_region
      _
    $region9: #{tpu_custom_call.1} parent=1 // pred_fallthru
      _
    // Predicated region
    $region10: #{tpu_custom_call.1} parent=1 // pred_check
      _
    $region11: #{tpu_custom_call.1} parent=1 // pred_check_branch
      %18 = sbr.rel (0) target = $region13
    $region12: #{tpu_custom_call.1} parent=1 // pred_region
      _
    $region13: #{tpu_custom_call.1} parent=1 // pred_fallthru
      _
    // Predicated region
    $region14: #{tpu_custom_call.1} parent=1 // pred_check
      _
    $region15: #{tpu_custom_call.1} parent=1 // pred_check_branch
      %20 = sbr.rel (0) target = $region17
    $region16: #{tpu_custom_call.1} parent=1 // pred_region
      _
    $region17: #{tpu_custom_call.1} parent=1 // pred_fallthru
      _
    // Predicated region
    $region18: #{tpu_custom_call.1} parent=1 // pred_check
      _
    $region19: #{tpu_custom_call.1} parent=1 // pred_check_branch
      %22 = sbr.rel (0) target = $region21
    $region20: #{tpu_custom_call.1} parent=1 // pred_region
      _
    $region21: #{tpu_custom_call.1} parent=1 // pred_fallthru
      _
    // Predicated region
    $region22: #{tpu_custom_call.1} parent=1 // pred_check
      _
    $region23: #{tpu_custom_call.1} parent=1 // pred_check_branch
      %24 = sbr.rel (0) target = $region25
    $region24: #{tpu_custom_call.1} parent=1 // pred_region
      _
    $region25: #{tpu_custom_call.1} parent=1 // pred_fallthru
      _
    // Predicated region
    $region26: #{tpu_custom_call.1} parent=1 // pred_check
      _
    $region27: #{tpu_custom_call.1} parent=1 // pred_check_branch
      %26 = sbr.rel (0) target = $region29
    $region28: #{tpu_custom_call.1} parent=1 // pred_region
      _
    $region29: #{tpu_custom_call.1} parent=1 // pred_fallthru
      _
    %v27 = vld [vmem:[%s0] sm:$0xff]
    %v28 = vld [vmem:[%s0 + $0x8] sm:$0xff]
    %v29 = vld [vmem:[%s0 + $0x10] sm:$0xff]
    %v30 = vld [vmem:[%s0 + $0x18] sm:$0xff]
    %v31 = vld [vmem:[%s0 + $0x20] sm:$0xff]
    %v32 = vld [vmem:[%s0 + $0x28] sm:$0xff]
    %v33 = vld [vmem:[%s0 + $0x30] sm:$0xff]
    %v34 = vld [vmem:[%s0 + $0x38] sm:$0xff]
    %v35 = vld [vmem:[%s0 + $0x40] sm:$0xff]
    %v36 = vld [vmem:[%s0 + $0x48] sm:$0xff]
    %v37 = vld [vmem:[%s0 + $0x50] sm:$0xff]
    %v38 = vld [vmem:[%s0 + $0x58] sm:$0xff]
    %v39 = vld [vmem:[%s0 + $0x60] sm:$0xff]
    %v40 = vld [vmem:[%s0 + $0x68] sm:$0xff]
    %v41 = vld [vmem:[%s0 + $0x70] sm:$0xff]
    %v42 = vld [vmem:[%s0 + $0x78] sm:$0xff]
    %v43 = vld [vmem:[%s0 + $0x80] sm:$0xff]
    %v44 = vld [vmem:[%s0 + $0x88] sm:$0xff]
    %v45 = vld [vmem:[%s0 + $0x90] sm:$0xff]
    %v46 = vld [vmem:[%s0 + $0x98] sm:$0xff]
    %v47 = vld [vmem:[%s0 + $0xa0] sm:$0xff]
    %v48 = vld [vmem:[%s0 + $0xa8] sm:$0xff]
    %v49 = vld [vmem:[%s0 + $0xb0] sm:$0xff]
    %v50 = vld [vmem:[%s0 + $0xb8] sm:$0xff]
    %v51 = vld [vmem:[%s0 + $0xc0] sm:$0xff]
    %v52 = vld [vmem:[%s0 + $0xc8] sm:$0xff]
    %v53 = vld [vmem:[%s0 + $0xd0] sm:$0xff]
    %v54 = vld [vmem:[%s0 + $0xd8] sm:$0xff]
    %v55 = vld [vmem:[%s0 + $0xe0] sm:$0xff]
    %v56 = vld [vmem:[%s0 + $0xe8] sm:$0xff]
    %v57 = vld [vmem:[%s0 + $0xf0] sm:$0xff]
    %v58 = vld [vmem:[%s0 + $0xf8] sm:$0xff]
    %v59 = vld [vmem:[%s1] sm:$0xff]
    %v60 = vld [vmem:[%s1 + $0x8] sm:$0xff]
    %v61 = vld [vmem:[%s1 + $0x10] sm:$0xff]
    %v62 = vld [vmem:[%s1 + $0x18] sm:$0xff]
    %v63 = vld [vmem:[%s1 + $0x20] sm:$0xff]
    %v64 = vld [vmem:[%s1 + $0x28] sm:$0xff]
    %v65 = vld [vmem:[%s1 + $0x30] sm:$0xff]
    %v66 = vld [vmem:[%s1 + $0x38] sm:$0xff]
    %v67 = vld [vmem:[%s2] sm:$0xff]
    %v68 = vld [vmem:[%s2 + $0x8] sm:$0xff]
    %v69 = vld [vmem:[%s2 + $0x10] sm:$0xff]
    %v70 = vld [vmem:[%s2 + $0x18] sm:$0xff]
    %v71 = vld [vmem:[%s2 + $0x20] sm:$0xff]
    %v72 = vld [vmem:[%s2 + $0x28] sm:$0xff]
    %v73 = vld [vmem:[%s2 + $0x30] sm:$0xff]
    %v74 = vld [vmem:[%s2 + $0x38] sm:$0xff]
    %76 = vset.pattern.permute.xlu0 0
    %77 = vperm.xlu0 %76, %v67
    %v78 = vpop.permute.xlu0 %77
    %81 = vset.pattern.permute.xlu0 0
    %82 = vperm.xlu0 %81, %v68
    %v83 = vpop.permute.xlu0 %82
    %86 = vset.pattern.permute.xlu0 0
    %87 = vperm.xlu0 %86, %v69
    %v88 = vpop.permute.xlu0 %87
    %91 = vset.pattern.permute.xlu0 0
    %92 = vperm.xlu0 %91, %v70
    %v93 = vpop.permute.xlu0 %92
    %96 = vset.pattern.permute.xlu0 0
    %97 = vperm.xlu0 %96, %v71
    %v98 = vpop.permute.xlu0 %97
    %101 = vset.pattern.permute.xlu0 0
    %102 = vperm.xlu0 %101, %v72
    %v103 = vpop.permute.xlu0 %102
    %106 = vset.pattern.permute.xlu0 0
    %107 = vperm.xlu0 %106, %v73
    %v108 = vpop.permute.xlu0 %107
    %111 = vset.pattern.permute.xlu0 0
    %112 = vperm.xlu0 %111, %v74
    %v113 = vpop.permute.xlu0 %112
    %vm115 = vcmask 64512
    %v117 = vsel %vm115, %v59, 0
    %v120 = vsel %vm115, %v60, 0
    %v123 = vsel %vm115, %v61, 0
    %v126 = vsel %vm115, %v62, 0
    %v129 = vsel %vm115, %v63, 0
    %v132 = vsel %vm115, %v64, 0
    %v135 = vsel %vm115, %v65, 0
    %v138 = vsel %vm115, %v66, 0
    %v141 = vsel %vm115, %v27, 0
    %v144 = vsel %vm115, %v28, 0
    %v147 = vsel %vm115, %v29, 0
    %v150 = vsel %vm115, %v30, 0
    %v153 = vsel %vm115, %v31, 0
    %v156 = vsel %vm115, %v32, 0
    %v159 = vsel %vm115, %v33, 0
    %v162 = vsel %vm115, %v34, 0
    %v165 = vsel %vm115, %v35, 0
    %v168 = vsel %vm115, %v36, 0
    %v171 = vsel %vm115, %v37, 0
    %v174 = vsel %vm115, %v38, 0
    %v177 = vsel %vm115, %v39, 0
    %v180 = vsel %vm115, %v40, 0
    %v183 = vsel %vm115, %v41, 0
    %v186 = vsel %vm115, %v42, 0
    %v189 = vsel %vm115, %v43, 0
    %v192 = vsel %vm115, %v44, 0
    %v195 = vsel %vm115, %v45, 0
    %v198 = vsel %vm115, %v46, 0
    %v201 = vsel %vm115, %v47, 0
    %v204 = vsel %vm115, %v48, 0
    %v207 = vsel %vm115, %v49, 0
    %v210 = vsel %vm115, %v50, 0
    %v213 = vsel %vm115, %v51, 0
    %v216 = vsel %vm115, %v52, 0
    %v219 = vsel %vm115, %v53, 0
    %v222 = vsel %vm115, %v54, 0
    %v225 = vsel %vm115, %v55, 0
    %v228 = vsel %vm115, %v56, 0
    %v231 = vsel %vm115, %v57, 0
    %v234 = vsel %vm115, %v58, 0
    %236 = vmatpush.xpose.msra.mxu0 %v186
    %237 = vmatpush.xpose.msra.mxu0 %v183
    %238 = vmatpush.xpose.msra.mxu0 %v180
    %239 = vmatpush.xpose.msra.mxu0 %v177
    %240 = vmatpush.xpose.msra.mxu0 %v174
    %241 = vmatpush.xpose.msra.mxu0 %v171
    %242 = vmatpush.xpose.msra.mxu0 %v168
    %243 = vmatpush.xpose.msra.mxu0 %v165
    %244 = vmatpush.xpose.msra.mxu0 %v162
    %245 = vmatpush.xpose.msra.mxu0 %v159
    %246 = vmatpush.xpose.msra.mxu0 %v156
    %247 = vmatpush.xpose.msra.mxu0 %v153
    %248 = vmatpush.xpose.msra.mxu0 %v150
    %249 = vmatpush.xpose.msra.mxu0 %v147
    %250 = vmatpush.xpose.msra.mxu0 %v144
    %251 = vmatpush.xpose.msra.mxu0 %v141
    %252 = vmatmul.f32.gmra.mxu0 %v117
    %v253 = vpop.f32.mrf.mxu0
    %v254 = vadd.f32 %v78, %v253
    %255 = vmatmul.f32.gmra.mxu0 %v120
    %v256 = vpop.f32.mrf.mxu0
    %v257 = vadd.f32 %v83, %v256
    %258 = vmatmul.f32.gmra.mxu0 %v123
    %v259 = vpop.f32.mrf.mxu0
    %v260 = vadd.f32 %v88, %v259
    %261 = vmatmul.f32.gmra.mxu0 %v126
    %v262 = vpop.f32.mrf.mxu0
    %v263 = vadd.f32 %v93, %v262
    %264 = vmatmul.f32.gmra.mxu0 %v129
    %v265 = vpop.f32.mrf.mxu0
    %v266 = vadd.f32 %v98, %v265
    %267 = vmatmul.f32.gmra.mxu0 %v132
    %v268 = vpop.f32.mrf.mxu0
    %v269 = vadd.f32 %v103, %v268
    %270 = vmatmul.f32.gmra.mxu0 %v135
    %v271 = vpop.f32.mrf.mxu0
    %v272 = vadd.f32 %v108, %v271
    %273 = vmatmul.f32.gmra.mxu0 %v138
    %v274 = vpop.f32.mrf.mxu0
    %v275 = vadd.f32 %v113, %v274
    %276 = vdwg.mxu0
    %277 = vmatpush.xpose.msra.mxu0 %v234
    %278 = vmatpush.xpose.msra.mxu0 %v231
    %279 = vmatpush.xpose.msra.mxu0 %v228
    %280 = vmatpush.xpose.msra.mxu0 %v225
    %281 = vmatpush.xpose.msra.mxu0 %v222
    %282 = vmatpush.xpose.msra.mxu0 %v219
    %283 = vmatpush.xpose.msra.mxu0 %v216
    %284 = vmatpush.xpose.msra.mxu0 %v213
    %285 = vmatpush.xpose.msra.mxu0 %v210
    %286 = vmatpush.xpose.msra.mxu0 %v207
    %287 = vmatpush.xpose.msra.mxu0 %v204
    %288 = vmatpush.xpose.msra.mxu0 %v201
    %289 = vmatpush.xpose.msra.mxu0 %v198
    %290 = vmatpush.xpose.msra.mxu0 %v195
    %291 = vmatpush.xpose.msra.mxu0 %v192
    %292 = vmatpush.xpose.msra.mxu0 %v189
    %293 = vmatmul.f32.gmra.mxu0 %v117
    %v294 = vpop.f32.mrf.mxu0
    %v295 = vadd.f32 %v78, %v294
    %296 = vmatmul.f32.gmra.mxu0 %v120
    %v297 = vpop.f32.mrf.mxu0
    %v298 = vadd.f32 %v83, %v297
    %299 = vmatmul.f32.gmra.mxu0 %v123
    %v300 = vpop.f32.mrf.mxu0
    %v301 = vadd.f32 %v88, %v300
    %302 = vmatmul.f32.gmra.mxu0 %v126
    %v303 = vpop.f32.mrf.mxu0
    %v304 = vadd.f32 %v93, %v303
    %305 = vmatmul.f32.gmra.mxu0 %v129
    %v306 = vpop.f32.mrf.mxu0
    %v307 = vadd.f32 %v98, %v306
    %308 = vmatmul.f32.gmra.mxu0 %v132
    %v309 = vpop.f32.mrf.mxu0
    %v310 = vadd.f32 %v103, %v309
    %311 = vmatmul.f32.gmra.mxu0 %v135
    %v312 = vpop.f32.mrf.mxu0
    %v313 = vadd.f32 %v108, %v312
    %314 = vmatmul.f32.gmra.mxu0 %v138
    %v315 = vpop.f32.mrf.mxu0
    %v316 = vadd.f32 %v113, %v315
    %317 = vdwg.mxu0
    %v318 = vtanh.pop %v254
    %v319 = vtanh.pop %v295
    %v320 = vtanh.pop %v257
    %v321 = vtanh.pop %v298
    %v322 = vtanh.pop %v260
    %v323 = vtanh.pop %v301
    %v324 = vtanh.pop %v263
    %v325 = vtanh.pop %v304
    %v326 = vtanh.pop %v266
    %v327 = vtanh.pop %v307
    %v328 = vtanh.pop %v269
    %v329 = vtanh.pop %v310
    %v330 = vtanh.pop %v272
    %v331 = vtanh.pop %v313
    %v332 = vtanh.pop %v275
    %v333 = vtanh.pop %v316
    %v334 = vld [vmem:[%s3] sm:$0xff]
    %v335 = vld [vmem:[%s3 + $0x8] sm:$0xff]
    %v336 = vld [vmem:[%s3 + $0x10] sm:$0xff]
    %v337 = vld [vmem:[%s3 + $0x18] sm:$0xff]
    %v338 = vld [vmem:[%s4] sm:$0xff]
    %v339 = vld [vmem:[%s4 + $0x8] sm:$0xff]
    %v340 = vld [vmem:[%s4 + $0x10] sm:$0xff]
    %v341 = vld [vmem:[%s4 + $0x18] sm:$0xff]
    %343 = vset.pattern.permute.xlu0 0
    %344 = vperm.xlu0 %343, %v338
    %v345 = vpop.permute.xlu0 %344
    %348 = vset.pattern.permute.xlu0 0
    %349 = vperm.xlu0 %348, %v339
    %v350 = vpop.permute.xlu0 %349
    %353 = vset.pattern.permute.xlu0 0
    %354 = vperm.xlu0 %353, %v340
    %v355 = vpop.permute.xlu0 %354
    %358 = vset.pattern.permute.xlu0 0
    %359 = vperm.xlu0 %358, %v341
    %v360 = vpop.permute.xlu0 %359
    %vm362 = vcmask 523264
    %v364 = vsel %vm362, %v334, 0
    %v367 = vsel %vm362, %v335, 0
    %v370 = vsel %vm362, %v336, 0
    %v373 = vsel %vm362, %v337, 0
    %375 = vmatpush.msra.mxu0 0.0
    %376 = vmatpush.msra.mxu0 0.0
    %377 = vmatpush.msra.mxu0 0.0
    %378 = vmatpush.msra.mxu0 0.0
    %379 = vmatpush.msra.mxu0 0.0
    %380 = vmatpush.msra.mxu0 0.0
    %381 = vmatpush.msra.mxu0 0.0
    %382 = vmatpush.msra.mxu0 0.0
    %383 = vmatpush.msra.mxu0 %v332
    %384 = vmatpush.msra.mxu0 %v330
    %385 = vmatpush.msra.mxu0 %v328
    %386 = vmatpush.msra.mxu0 %v326
    %387 = vmatpush.msra.mxu0 %v324
    %388 = vmatpush.msra.mxu0 %v322
    %389 = vmatpush.msra.mxu0 %v320
    %390 = vmatpush.msra.mxu0 %v318
    %391 = vmatmul.f32.gmra.mxu0 %v364
    %v392 = vpop.f32.mrf.mxu0
    %v393 = vadd.f32 %v345, %v392
    %394 = vmatmul.f32.gmra.mxu0 %v367
    %v395 = vpop.f32.mrf.mxu0
    %v396 = vadd.f32 %v350, %v395
    %397 = vmatmul.f32.gmra.mxu0 %v370
    %v398 = vpop.f32.mrf.mxu0
    %v399 = vadd.f32 %v355, %v398
    %400 = vmatmul.f32.gmra.mxu0 %v373
    %v401 = vpop.f32.mrf.mxu0
    %v402 = vadd.f32 %v360, %v401
    %403 = vdwg.mxu0
    %404 = vmatpush.msra.mxu0 0.0
    %405 = vmatpush.msra.mxu0 0.0
    %406 = vmatpush.msra.mxu0 0.0
    %407 = vmatpush.msra.mxu0 0.0
    %408 = vmatpush.msra.mxu0 0.0
    %409 = vmatpush.msra.mxu0 0.0
    %410 = vmatpush.msra.mxu0 0.0
    %411 = vmatpush.msra.mxu0 0.0
    %412 = vmatpush.msra.mxu0 %v333
    %413 = vmatpush.msra.mxu0 %v331
    %414 = vmatpush.msra.mxu0 %v329
    %415 = vmatpush.msra.mxu0 %v327
    %416 = vmatpush.msra.mxu0 %v325
    %417 = vmatpush.msra.mxu0 %v323
    %418 = vmatpush.msra.mxu0 %v321
    %419 = vmatpush.msra.mxu0 %v319
    %420 = vmatmul.f32.gmra.mxu0 %v364
    %v421 = vpop.f32.mrf.mxu0
    %v422 = vadd.f32 %v345, %v421
    %423 = vmatmul.f32.gmra.mxu0 %v367
    %v424 = vpop.f32.mrf.mxu0
    %v425 = vadd.f32 %v350, %v424
    %426 = vmatmul.f32.gmra.mxu0 %v370
    %v427 = vpop.f32.mrf.mxu0
    %v428 = vadd.f32 %v355, %v427
    %429 = vmatmul.f32.gmra.mxu0 %v373
    %v430 = vpop.f32.mrf.mxu0
    %v431 = vadd.f32 %v360, %v430
    %432 = vdwg.mxu0
    %v433 = vtanh.pop %v393
    %v434 = vtanh.pop %v422
    %v435 = vtanh.pop %v396
    %v436 = vtanh.pop %v425
    %v437 = vtanh.pop %v399
    %v438 = vtanh.pop %v428
    %v439 = vtanh.pop %v402
    %v440 = vtanh.pop %v431
    %v441 = vld [vmem:[%s5] sm:$0xf]
    %v442 = vld [vmem:[%s6] sm:$0xf]
    %444 = vset.pattern.permute.xlu0 0
    %445 = vperm.xlu0 %444, %v442
    %v446 = vpop.permute.xlu0 %445
    %vm448 = vcmask 261120
    %v450 = vsel %vm448, %v441, 0
    %452 = vmatpush.msra.mxu0 0.0
    %453 = vmatpush.msra.mxu0 0.0
    %454 = vmatpush.msra.mxu0 0.0
    %455 = vmatpush.msra.mxu0 0.0
    %456 = vmatpush.msra.mxu0 0.0
    %457 = vmatpush.msra.mxu0 0.0
    %458 = vmatpush.msra.mxu0 0.0
    %459 = vmatpush.msra.mxu0 0.0
    %460 = vmatpush.msra.mxu0 0.0
    %461 = vmatpush.msra.mxu0 0.0
    %462 = vmatpush.msra.mxu0 0.0
    %463 = vmatpush.msra.mxu0 0.0
    %464 = vmatpush.msra.mxu0 %v439
    %465 = vmatpush.msra.mxu0 %v437
    %466 = vmatpush.msra.mxu0 %v435
    %467 = vmatpush.msra.mxu0 %v433
    %468 = vmatmul.f32.gmra.mxu0 %v450
    %v469 = vpop.f32.mrf.mxu0
    %v470 = vadd.f32 %v446, %v469
    %471 = vdwg.mxu0
    %472 = vmatpush.msra.mxu0 0.0
    %473 = vmatpush.msra.mxu0 0.0
    %474 = vmatpush.msra.mxu0 0.0
    %475 = vmatpush.msra.mxu0 0.0
    %476 = vmatpush.msra.mxu0 0.0
    %477 = vmatpush.msra.mxu0 0.0
    %478 = vmatpush.msra.mxu0 0.0
    %479 = vmatpush.msra.mxu0 0.0
    %480 = vmatpush.msra.mxu0 0.0
    %481 = vmatpush.msra.mxu0 0.0
    %482 = vmatpush.msra.mxu0 0.0
    %483 = vmatpush.msra.mxu0 0.0
    %484 = vmatpush.msra.mxu0 %v440
    %485 = vmatpush.msra.mxu0 %v438
    %486 = vmatpush.msra.mxu0 %v436
    %487 = vmatpush.msra.mxu0 %v434
    %488 = vmatmul.f32.gmra.mxu0 %v450
    %v489 = vpop.f32.mrf.mxu0
    %v490 = vadd.f32 %v446, %v489
    %491 = vdwg.mxu0
    %vm492 = vcmask 1043456
    %v493 = vsel %vm492, %v470, -inf
    %v494 = vrot.slane %v493, 4
    %v495 = vmax.f32 %v493, %v494
    %v496 = vrot.slane %v495, 2
    %v497 = vmax.f32 %v495, %v496
    %v498 = vrot.slane %v497, 1
    %v499 = vmax.f32 %v497, %v498
    %v500 = vsel %vm492, %v490, -inf
    %v501 = vrot.slane %v500, 4
    %v502 = vmax.f32 %v500, %v501
    %v503 = vrot.slane %v502, 2
    %v504 = vmax.f32 %v502, %v503
    %v505 = vrot.slane %v504, 1
    %v506 = vmax.f32 %v504, %v505
    %v507 = vsub.f32 %v470, %v499
    %v508 = vsub.f32 %v490, %v506
    %v509 = vmul.f32 %v507, 1.442695
    %v510 = vpow.pop %v509
    %v511 = vmul.f32 %v508, 1.442695
    %v512 = vpow.pop %v511
    %v513 = vsel %vm492, %v510, 0.0
    %v514 = vrot.slane %v513, 4
    %v515 = vadd.f32 %v513, %v514
    %v516 = vrot.slane %v515, 2
    %v517 = vadd.f32 %v515, %v516
    %v518 = vrot.slane %v517, 1
    %v519 = vadd.f32 %v517, %v518
    %v520 = vsel %vm492, %v512, 0.0
    %v521 = vrot.slane %v520, 4
    %v522 = vadd.f32 %v520, %v521
    %v523 = vrot.slane %v522, 2
    %v524 = vadd.f32 %v522, %v523
    %v525 = vrot.slane %v524, 1
    %v526 = vadd.f32 %v524, %v525
    %v527 = vrcp.pop %v519
    %v528 = vmul.f32 %v519, %v527
    %v529 = vsub.f32 1.0, %v528
    %v530 = vmul.f32 %v527, %v529
    %v531 = vadd.f32 %v527, %v530
    %vm532 = vweird.f32 %v519
    %vm533 = vweird.f32 %v527
    %vm534 = vmor %vm532, %vm533
    %v535 = vsel %vm534, %v527, %v531
    %v536 = vand.u32 2147483647, %v519
    %vm537 = vcmp.eq.f32.partialorder %v536, 8.507059e+37
    %v538 = vand.u32 %v519, 2147483648
    %v539 = vor.u32 1.1754944e-38, %v538
    %v540 = vsel %vm537, %v539, %v535
    %v541 = vmul.f32 %v510, %v540
    %v542 = vrcp.pop %v526
    %v543 = vmul.f32 %v526, %v542
    %v544 = vsub.f32 1.0, %v543
    %v545 = vmul.f32 %v542, %v544
    %v546 = vadd.f32 %v542, %v545
    %vm547 = vweird.f32 %v526
    %vm548 = vweird.f32 %v542
    %vm549 = vmor %vm547, %vm548
    %v550 = vsel %vm549, %v542, %v546
    %v551 = vand.u32 2147483647, %v526
    %vm552 = vcmp.eq.f32.partialorder %v551, 8.507059e+37
    %v553 = vand.u32 %v526, 2147483648
    %v554 = vor.u32 1.1754944e-38, %v553
    %v555 = vsel %vm552, %v554, %v550
    %v556 = vmul.f32 %v512, %v555
    %v559 = vrot.slane %v556, 4
    %v560 = vsel %vm492, %v541, %v559
    %562 = vst [vmem:[#allocation2] sm:$0xff] %v560
    // Predicated region
    $region30: #{tpu_custom_call.1} parent=1 // pred_check
      _
    $region31: #{tpu_custom_call.1} parent=1 // pred_check_branch
      %564 = sbr.rel (0) target = $region33
    $region32: #{tpu_custom_call.1} parent=1 // pred_region
      %566 = vsyncadd [#allocation3], 0
      %s568 = sshll.u32 [#allocation2], 4
      %s569 = int_to_ptr.vmem [resolvable:$true] %s568
      %s570 = sshll.u32 %s7, 4
      %s571 = int_to_ptr.hbm [resolvable:$true] %s570
      %573 = dma.vmem_to_hbm [thread:$0]  %s569, 128, %s571, [#allocation3]
    $region33: #{tpu_custom_call.1} parent=1 // pred_fallthru
      _
    // Predicated region
    $region34: #{tpu_custom_call.1} parent=1 // pred_check
      _
    $region35: #{tpu_custom_call.1} parent=1 // pred_check_branch
      %575 = sbr.rel (0) target = $region37
    $region36: #{tpu_custom_call.1} parent=1 // pred_region
      %577 = dma.done [#allocation3], 128
    $region37: #{tpu_custom_call.1} parent=1 // pred_fallthru
      _
    %578 = vsyncpa [#allocation3], 1

</llo_original>
